<compile_context>
chip_gen: v7x
topology: tpu7x:2x2x1
jax: 0.10.0
libtpu: 0.0.40
codegen_flags: <defaults>
</compile_context>

<pallas_src>
from functools import partial

import jax
import jax.numpy as jnp
from jax.experimental import pallas as pl
from jax.experimental.pallas import tpu as pltpu

LANE = 128   # vreg lane width
SUB = 8      # f32 sublane count


def _n_tensors_diff_kernel(w_smem, ref_ref, tar_ref, out_ref, *,
                           n_pairs, n_ch, comb_bias_g, chunk_rows):
    """One grid step.

    w_smem  : (4*n_pairs*n_ch,) f32 SMEM,
              layout [w_ref | w_tar | bias_diff | gamma*comb_w*w_ch].
    ref_ref : (1, C, tile_r, 128) VMEM tile, native dtype.
    tar_ref : (1, C, tile_r, 128) VMEM tile, native dtype.
    out_ref : (1, tile_r, 128) f32 VMEM tile.
    """
    stride = n_pairs * n_ch
    tile_b = out_ref.shape[0]
    tile_r = out_ref.shape[1]
    n_chunks = tile_r // chunk_rows
    tail_rows = tile_r - n_chunks * chunk_rows
    unroll_channels = (n_ch * n_pairs) <= 64
    unroll_chunks = n_chunks <= 8

    # Hoisted once per grid step (not per batch row / chunk): SMEM scalar
    # reads and the bias splat(s).
    if unroll_channels:
        scal = [(w_smem[0 * stride + i], w_smem[1 * stride + i],
                 w_smem[2 * stride + i], w_smem[3 * stride + i])
                for i in range(stride)]

    splat_cache = {}

    def bias_splat(rows):
        if rows not in splat_cache:
            splat_cache[rows] = jnp.full((rows, LANE), comb_bias_g,
                                         dtype=jnp.float32)
        return splat_cache[rows]

    def do_chunk(b, row0, rows):
        # Accumulator stays vreg-resident: the full channel x pair reduction
        # runs on a (rows, 128) chunk before a single store.
        acc = bias_splat(rows)
        if unroll_channels:
            for c in range(n_ch):
                r = ref_ref[b, c, pl.ds(row0, rows), :].astype(jnp.float32)
                t = tar_ref[b, c, pl.ds(row0, rows), :].astype(jnp.float32)
                for n in range(n_pairs):
                    wr, wt, bd, wc = scal[n * n_ch + c]
                    d = r * wr - t * wt + bd          # VALU
                    # TODO(synk): on v6e/v7x a bf16 tanh (~2x EUP throughput)
                    # is possible at ~1e-3 output error; kept f32 here for
                    # accuracy and v5e compatibility (no bf16 EUP on v5e).
                    th = jnp.tanh(d)                  # EUP (binding unit)
                    acc = acc + (th * th) * wc        # VALU accumulate (no XLU)
        else:
            def c_body(c, acc):
                r = ref_ref[b, c, pl.ds(row0, rows), :].astype(jnp.float32)
                t = tar_ref[b, c, pl.ds(row0, rows), :].astype(jnp.float32)
                for n in range(n_pairs):
                    idx = n * n_ch + c
                    wr = w_smem[0 * stride + idx]
                    wt = w_smem[1 * stride + idx]
                    bd = w_smem[2 * stride + idx]
                    wc = w_smem[3 * stride + idx]
                    d = r * wr - t * wt + bd
                    th = jnp.tanh(d)
                    acc = acc + (th * th) * wc
                return acc
            acc = jax.lax.fori_loop(0, n_ch, c_body, acc, unroll=4)
        # gamma_sigmoid already folded into weights/bias -> bare sigmoid.
        out_ref[b, pl.ds(row0, rows), :] = (
            jax.nn.sigmoid(acc).astype(out_ref.dtype))

    for b in range(tile_b):
        if n_chunks > 0:
            if unroll_chunks:
                for s in range(n_chunks):
                    do_chunk(b, s * chunk_rows, chunk_rows)
            else:
                @pl.loop(0, n_chunks)
                def _(s, b=b):
                    do_chunk(b, pl.multiple_of(s * chunk_rows, chunk_rows),
                             chunk_rows)
        if tail_rows > 0:
            do_chunk(b, n_chunks * chunk_rows, tail_rows)


def _largest_aligned_divisor(n, limit, align):
    """Largest d <= limit with n % d == 0 and d % align == 0, or None."""
    d = (min(limit, n) // align) * align
    while d >= align:
        if n % d == 0:
            return d
        d -= align
    return None


def _tpu_vmem_capacity_bytes():
    try:
        return int(pltpu.get_tpu_info().vmem_capacity_bytes)
    except Exception:
        return 64 * 1024 * 1024   # conservative (v7x-sized) fallback


def n_tensors_difference(ref, tar, params, gamma_sigmoid=10.0):
    """params = (w_ref, w_tar, bias_diff, w_channels, comb_weights, comb_bias)

    w_ref, w_tar, bias_diff, w_channels: (n_pairs, C)
    comb_weights: (n_pairs,)   comb_bias: python float
    """
    w_ref, w_tar, bias_diff, w_ch, comb_w, comb_bias = params
    n_pairs, C = w_ref.shape
    B, Cx, H, W = ref.shape
    assert Cx == C and tar.shape == ref.shape
    HW = H * W
    itemsize = jnp.dtype(ref.dtype).itemsize
    gamma = float(gamma_sigmoid)

    # Fold combination weights (only when n_pairs > 1, matching PyTorch) AND
    # gamma_sigmoid into the per-channel weights; fold gamma into the bias too.
    w_ch_eff = w_ch * comb_w[:, None] if n_pairs > 1 else w_ch
    w_ch_eff = w_ch_eff * gamma
    comb_bias_g = gamma * float(comb_bias)

    # All scalar parameters packed into one flat f32 SMEM array.
    w_packed = jnp.concatenate([
        w_ref.reshape(-1), w_tar.reshape(-1),
        bias_diff.reshape(-1), w_ch_eff.reshape(-1)]).astype(jnp.float32)

    # ---------------- generation-aware budgets ----------------
    vmem_cap = _tpu_vmem_capacity_bytes()
    if vmem_cap > 80 * 1024 * 1024:          # v5e / v6e (128 MiB physical VMEM)
        block_budget = 6 * 1024 * 1024
        vmem_limit = 64 * 1024 * 1024
    else:                                    # v7x (64 MiB physical VMEM)
        block_budget = 4 * 1024 * 1024
        vmem_limit = 48 * 1024 * 1024

    # ---------------- tile selection ----------------
    # Sublane granularity matching the dtype's native packing:
    # 8 rows f32, 16 rows bf16, 32 rows int8/fp8.
    sub_native = SUB * max(1, 4 // itemsize)
    R = pl.cdiv(HW, LANE)                    # spatial rows of 128 lanes
    per_row_bytes = C * LANE * itemsize      # per row, per input, per batch elem
    rows_budget = max(sub_native,
                      (block_budget // per_row_bytes) // sub_native * sub_native)

    if R <= rows_budget:
        tile_r, r_pad = R, R                 # full plane per batch elem, no pad
    else:
        tile_r = (_largest_aligned_divisor(R, rows_budget, sub_native)
                  if HW % LANE == 0 else None)
        if tile_r is not None:
            r_pad = R                        # divides exactly -> no pad copy
        elif HW % LANE == 0 and C * R * LANE * itemsize <= vmem_limit // 6:
            tile_r, r_pad = R, R             # big but fits: still avoid padding
        else:
            # TODO(synk): handle the ragged tail with pl.BoundedSlice instead
            # of padding to remove this last copy as well.
            tile_r = rows_budget
            r_pad = pl.cdiv(R, tile_r) * tile_r

    # v7x has 2 TensorCores: guarantee >= 2 steps on a "parallel" grid axis.
    if B == 1 and r_pad // tile_r == 1 and tile_r % (2 * sub_native) == 0:
        tile_r //= 2

    hw_pad = r_pad * LANE
    ref3 = ref.reshape(B, C, HW)
    tar3 = tar.reshape(B, C, HW)
    if hw_pad != HW:                         # only when truly unavoidable
        pad = ((0, 0), (0, 0), (0, hw_pad - HW))
        ref3 = jnp.pad(ref3, pad)
        tar3 = jnp.pad(tar3, pad)
    # Lane+sublane-dense view; inputs stay in native dtype (kernel upcasts).
    ref4 = ref3.reshape(B, C, r_pad, LANE)
    tar4 = tar3.reshape(B, C, r_pad, LANE)

    grid = (B, r_pad // tile_r)
    chunk_rows = 4 * sub_native              # vreg-resident accumulator chunk

    kernel = partial(_n_tensors_diff_kernel,
                     n_pairs=n_pairs, n_ch=C,
                     comb_bias_g=comb_bias_g, chunk_rows=chunk_rows)

    out = pl.pallas_call(
        kernel,
        out_shape=jax.ShapeDtypeStruct((B, r_pad, LANE), jnp.float32),
        grid=grid,
        in_specs=[
            pl.BlockSpec(memory_space=pltpu.MemorySpace.SMEM),   # packed weights
            pl.BlockSpec((1, C, tile_r, LANE), lambda b, r: (b, 0, r, 0)),
            pl.BlockSpec((1, C, tile_r, LANE), lambda b, r: (b, 0, r, 0)),
        ],
        out_specs=pl.BlockSpec((1, tile_r, LANE), lambda b, r: (b, r, 0)),
        compiler_params=pltpu.CompilerParams(
            dimension_semantics=("parallel", "parallel"),
            vmem_limit_bytes=vmem_limit),
    )(w_packed, ref4, tar4)

    out = out.reshape(B, hw_pad)[:, :HW].reshape(B, H, W)
    # matches `return out.squeeze()` in PyTorch
    return jnp.squeeze(out)


def _reference(ref, tar, params, gamma_sigmoid=10.0):
    """Plain-JAX mirror of the PyTorch forward, for verification."""
    w_ref, w_tar, bias_diff, w_ch, comb_w, comb_bias = params
    n_pairs = w_ref.shape[0]
    branch_outs = []
    for n in range(n_pairs):
        r = ref * w_ref[n][None, :, None, None]
        t = tar * w_tar[n][None, :, None, None]
        o = r - t + bias_diff[n][None, :, None, None]
        o = jnp.tanh(o) ** 2
        o = o * w_ch[n][None, :, None, None]
        branch_outs.append(o.sum(axis=1))
    out = jnp.stack(branch_outs, 0)              # (N, B, H, W)
    if n_pairs > 1:
        out = (out * comb_w[:, None, None, None]).sum(axis=0)
    else:
        out = out[0]
    out = jax.nn.sigmoid(gamma_sigmoid * (out + comb_bias))
    return jnp.squeeze(out)


if __name__ == "__main__":
    # Small shapes: batch=2, channels=4 (== weights_per_tensor), spatial=16x16,
    # n_pairs=2, gamma_sigmoid=10.0
    B, C, H, W = 2, 4, 16, 16
    n_pairs = 2
    gamma_sigmoid = 10.0

    key = jax.random.PRNGKey(0)
    k1, k2 = jax.random.split(key)
    ref_tensor = jax.random.normal(k1, (B, C, H, W), dtype=jnp.float32)
    tar_tensor = jax.random.normal(k2, (B, C, H, W), dtype=jnp.float32)

    # Deterministic parameter init, exactly as the PyTorch __init__:
    w_ref = jnp.ones((n_pairs, C), jnp.float32)       # weights_ref per branch
    w_tar = jnp.ones((n_pairs, C), jnp.float32)       # weights_tar per branch
    bias_diff = jnp.full((n_pairs, C), 0.01, jnp.float32)
    w_channels = jnp.ones((n_pairs, C), jnp.float32)
    comb_weights = jnp.ones((n_pairs,), jnp.float32)
    comb_bias = -2.15

    params = (w_ref, w_tar, bias_diff, w_channels, comb_weights, comb_bias)

    out = n_tensors_difference(ref_tensor, tar_tensor, params, gamma_sigmoid)
    out = jax.block_until_ready(out)

    expected = _reference(ref_tensor, tar_tensor, params, gamma_sigmoid)
    assert out.shape == expected.shape, (out.shape, expected.shape)
    assert jnp.allclose(out, expected, atol=1e-5, rtol=1e-5)

    print("KERNEL_OK")
</pallas_src>

<mosaic_0001>
module attributes {stable_mosaic.version = 11 : i64} {
  func.func @_n_tensors_diff_kernel(%arg0: i32, %arg1: i32, %arg2: memref<32xf32, #tpu.memory_space<smem>>, %arg3: memref<1x4x2x128xf32, #tpu.memory_space<vmem>>, %arg4: memref<1x4x2x128xf32, #tpu.memory_space<vmem>>, %arg5: memref<1x2x128xf32, #tpu.memory_space<vmem>>) attributes {dimension_semantics = [#tpu.dimension_semantics<parallel>, #tpu.dimension_semantics<parallel>], iteration_bounds = array<i64: 2, 1>, scalar_prefetch = 0 : i64, scratch_operands = 0 : i64, tpu.core_type = #tpu.core_type<tc>, window_params = [{transform_indices = @transform_0, window_bounds = array<i64: 32>}, {transform_indices = @transform_1, window_bounds = array<i64: 1, 4, 2, 128>}, {transform_indices = @transform_2, window_bounds = array<i64: 1, 4, 2, 128>}, {transform_indices = @transform_3, window_bounds = array<i64: 1, 2, 128>}]} {
    %c0 = arith.constant 0 : index
    %0 = memref.load %arg2[%c0] : memref<32xf32, #tpu.memory_space<smem>>
    %c8 = arith.constant 8 : index
    %1 = memref.load %arg2[%c8] : memref<32xf32, #tpu.memory_space<smem>>
    %c16 = arith.constant 16 : index
    %2 = memref.load %arg2[%c16] : memref<32xf32, #tpu.memory_space<smem>>
    %c24 = arith.constant 24 : index
    %3 = memref.load %arg2[%c24] : memref<32xf32, #tpu.memory_space<smem>>
    %c1 = arith.constant 1 : index
    %4 = memref.load %arg2[%c1] : memref<32xf32, #tpu.memory_space<smem>>
    %c9 = arith.constant 9 : index
    %5 = memref.load %arg2[%c9] : memref<32xf32, #tpu.memory_space<smem>>
    %c17 = arith.constant 17 : index
    %6 = memref.load %arg2[%c17] : memref<32xf32, #tpu.memory_space<smem>>
    %c25 = arith.constant 25 : index
    %7 = memref.load %arg2[%c25] : memref<32xf32, #tpu.memory_space<smem>>
    %c2 = arith.constant 2 : index
    %8 = memref.load %arg2[%c2] : memref<32xf32, #tpu.memory_space<smem>>
    %c10 = arith.constant 10 : index
    %9 = memref.load %arg2[%c10] : memref<32xf32, #tpu.memory_space<smem>>
    %c18 = arith.constant 18 : index
    %10 = memref.load %arg2[%c18] : memref<32xf32, #tpu.memory_space<smem>>
    %c26 = arith.constant 26 : index
    %11 = memref.load %arg2[%c26] : memref<32xf32, #tpu.memory_space<smem>>
    %c3 = arith.constant 3 : index
    %12 = memref.load %arg2[%c3] : memref<32xf32, #tpu.memory_space<smem>>
    %c11 = arith.constant 11 : index
    %13 = memref.load %arg2[%c11] : memref<32xf32, #tpu.memory_space<smem>>
    %c19 = arith.constant 19 : index
    %14 = memref.load %arg2[%c19] : memref<32xf32, #tpu.memory_space<smem>>
    %c27 = arith.constant 27 : index
    %15 = memref.load %arg2[%c27] : memref<32xf32, #tpu.memory_space<smem>>
    %c4 = arith.constant 4 : index
    %16 = memref.load %arg2[%c4] : memref<32xf32, #tpu.memory_space<smem>>
    %c12 = arith.constant 12 : index
    %17 = memref.load %arg2[%c12] : memref<32xf32, #tpu.memory_space<smem>>
    %c20 = arith.constant 20 : index
    %18 = memref.load %arg2[%c20] : memref<32xf32, #tpu.memory_space<smem>>
    %c28 = arith.constant 28 : index
    %19 = memref.load %arg2[%c28] : memref<32xf32, #tpu.memory_space<smem>>
    %c5 = arith.constant 5 : index
    %20 = memref.load %arg2[%c5] : memref<32xf32, #tpu.memory_space<smem>>
    %c13 = arith.constant 13 : index
    %21 = memref.load %arg2[%c13] : memref<32xf32, #tpu.memory_space<smem>>
    %c21 = arith.constant 21 : index
    %22 = memref.load %arg2[%c21] : memref<32xf32, #tpu.memory_space<smem>>
    %c29 = arith.constant 29 : index
    %23 = memref.load %arg2[%c29] : memref<32xf32, #tpu.memory_space<smem>>
    %c6 = arith.constant 6 : index
    %24 = memref.load %arg2[%c6] : memref<32xf32, #tpu.memory_space<smem>>
    %c14 = arith.constant 14 : index
    %25 = memref.load %arg2[%c14] : memref<32xf32, #tpu.memory_space<smem>>
    %c22 = arith.constant 22 : index
    %26 = memref.load %arg2[%c22] : memref<32xf32, #tpu.memory_space<smem>>
    %c30 = arith.constant 30 : index
    %27 = memref.load %arg2[%c30] : memref<32xf32, #tpu.memory_space<smem>>
    %c7 = arith.constant 7 : index
    %28 = memref.load %arg2[%c7] : memref<32xf32, #tpu.memory_space<smem>>
    %c15 = arith.constant 15 : index
    %29 = memref.load %arg2[%c15] : memref<32xf32, #tpu.memory_space<smem>>
    %c23 = arith.constant 23 : index
    %30 = memref.load %arg2[%c23] : memref<32xf32, #tpu.memory_space<smem>>
    %c31 = arith.constant 31 : index
    %31 = memref.load %arg2[%c31] : memref<32xf32, #tpu.memory_space<smem>>
    %cst = arith.constant -2.150000e+01 : f32
    %32 = vector.broadcast %cst : f32 to vector<2x128xf32>
    %c0_0 = arith.constant 0 : index
    %c0_1 = arith.constant 0 : index
    %c0_2 = arith.constant 0 : index
    %c0_3 = arith.constant 0 : index
    %33 = vector.load %arg3[%c0_0, %c0_1, %c0_2, %c0_3] : memref<1x4x2x128xf32, #tpu.memory_space<vmem>>, vector<1x1x2x128xf32>
    %34 = vector.shape_cast %33 : vector<1x1x2x128xf32> to vector<2x128xf32>
    %c0_4 = arith.constant 0 : index
    %c0_5 = arith.constant 0 : index
    %c0_6 = arith.constant 0 : index
    %c0_7 = arith.constant 0 : index
    %35 = vector.load %arg4[%c0_4, %c0_5, %c0_6, %c0_7] : memref<1x4x2x128xf32, #tpu.memory_space<vmem>>, vector<1x1x2x128xf32>
    %36 = vector.shape_cast %35 : vector<1x1x2x128xf32> to vector<2x128xf32>
    %37 = vector.broadcast %0 : f32 to vector<2x128xf32>
    %38 = arith.mulf %34, %37 : vector<2x128xf32>
    %39 = vector.broadcast %1 : f32 to vector<2x128xf32>
    %40 = arith.mulf %36, %39 : vector<2x128xf32>
    %41 = arith.subf %38, %40 : vector<2x128xf32>
    %42 = vector.broadcast %2 : f32 to vector<2x128xf32>
    %43 = arith.addf %41, %42 : vector<2x128xf32>
    %44 = math.tanh %43 : vector<2x128xf32>
    %45 = arith.mulf %44, %44 : vector<2x128xf32>
    %46 = vector.broadcast %3 : f32 to vector<2x128xf32>
    %47 = arith.mulf %45, %46 : vector<2x128xf32>
    %48 = arith.addf %32, %47 : vector<2x128xf32>
    %49 = vector.broadcast %16 : f32 to vector<2x128xf32>
    %50 = arith.mulf %34, %49 : vector<2x128xf32>
    %51 = vector.broadcast %17 : f32 to vector<2x128xf32>
    %52 = arith.mulf %36, %51 : vector<2x128xf32>
    %53 = arith.subf %50, %52 : vector<2x128xf32>
    %54 = vector.broadcast %18 : f32 to vector<2x128xf32>
    %55 = arith.addf %53, %54 : vector<2x128xf32>
    %56 = math.tanh %55 : vector<2x128xf32>
    %57 = arith.mulf %56, %56 : vector<2x128xf32>
    %58 = vector.broadcast %19 : f32 to vector<2x128xf32>
    %59 = arith.mulf %57, %58 : vector<2x128xf32>
    %60 = arith.addf %48, %59 : vector<2x128xf32>
    %c0_8 = arith.constant 0 : index
    %c1_9 = arith.constant 1 : index
    %c0_10 = arith.constant 0 : index
    %c0_11 = arith.constant 0 : index
    %61 = vector.load %arg3[%c0_8, %c1_9, %c0_10, %c0_11] : memref<1x4x2x128xf32, #tpu.memory_space<vmem>>, vector<1x1x2x128xf32>
    %62 = vector.shape_cast %61 : vector<1x1x2x128xf32> to vector<2x128xf32>
    %c0_12 = arith.constant 0 : index
    %c1_13 = arith.constant 1 : index
    %c0_14 = arith.constant 0 : index
    %c0_15 = arith.constant 0 : index
    %63 = vector.load %arg4[%c0_12, %c1_13, %c0_14, %c0_15] : memref<1x4x2x128xf32, #tpu.memory_space<vmem>>, vector<1x1x2x128xf32>
    %64 = vector.shape_cast %63 : vector<1x1x2x128xf32> to vector<2x128xf32>
    %65 = vector.broadcast %4 : f32 to vector<2x128xf32>
    %66 = arith.mulf %62, %65 : vector<2x128xf32>
    %67 = vector.broadcast %5 : f32 to vector<2x128xf32>
    %68 = arith.mulf %64, %67 : vector<2x128xf32>
    %69 = arith.subf %66, %68 : vector<2x128xf32>
    %70 = vector.broadcast %6 : f32 to vector<2x128xf32>
    %71 = arith.addf %69, %70 : vector<2x128xf32>
    %72 = math.tanh %71 : vector<2x128xf32>
    %73 = arith.mulf %72, %72 : vector<2x128xf32>
    %74 = vector.broadcast %7 : f32 to vector<2x128xf32>
    %75 = arith.mulf %73, %74 : vector<2x128xf32>
    %76 = arith.addf %60, %75 : vector<2x128xf32>
    %77 = vector.broadcast %20 : f32 to vector<2x128xf32>
    %78 = arith.mulf %62, %77 : vector<2x128xf32>
    %79 = vector.broadcast %21 : f32 to vector<2x128xf32>
    %80 = arith.mulf %64, %79 : vector<2x128xf32>
    %81 = arith.subf %78, %80 : vector<2x128xf32>
    %82 = vector.broadcast %22 : f32 to vector<2x128xf32>
    %83 = arith.addf %81, %82 : vector<2x128xf32>
    %84 = math.tanh %83 : vector<2x128xf32>
    %85 = arith.mulf %84, %84 : vector<2x128xf32>
    %86 = vector.broadcast %23 : f32 to vector<2x128xf32>
    %87 = arith.mulf %85, %86 : vector<2x128xf32>
    %88 = arith.addf %76, %87 : vector<2x128xf32>
    %c0_16 = arith.constant 0 : index
    %c2_17 = arith.constant 2 : index
    %c0_18 = arith.constant 0 : index
    %c0_19 = arith.constant 0 : index
    %89 = vector.load %arg3[%c0_16, %c2_17, %c0_18, %c0_19] : memref<1x4x2x128xf32, #tpu.memory_space<vmem>>, vector<1x1x2x128xf32>
    %90 = vector.shape_cast %89 : vector<1x1x2x128xf32> to vector<2x128xf32>
    %c0_20 = arith.constant 0 : index
    %c2_21 = arith.constant 2 : index
    %c0_22 = arith.constant 0 : index
    %c0_23 = arith.constant 0 : index
    %91 = vector.load %arg4[%c0_20, %c2_21, %c0_22, %c0_23] : memref<1x4x2x128xf32, #tpu.memory_space<vmem>>, vector<1x1x2x128xf32>
    %92 = vector.shape_cast %91 : vector<1x1x2x128xf32> to vector<2x128xf32>
    %93 = vector.broadcast %8 : f32 to vector<2x128xf32>
    %94 = arith.mulf %90, %93 : vector<2x128xf32>
    %95 = vector.broadcast %9 : f32 to vector<2x128xf32>
    %96 = arith.mulf %92, %95 : vector<2x128xf32>
    %97 = arith.subf %94, %96 : vector<2x128xf32>
    %98 = vector.broadcast %10 : f32 to vector<2x128xf32>
    %99 = arith.addf %97, %98 : vector<2x128xf32>
    %100 = math.tanh %99 : vector<2x128xf32>
    %101 = arith.mulf %100, %100 : vector<2x128xf32>
    %102 = vector.broadcast %11 : f32 to vector<2x128xf32>
    %103 = arith.mulf %101, %102 : vector<2x128xf32>
    %104 = arith.addf %88, %103 : vector<2x128xf32>
    %105 = vector.broadcast %24 : f32 to vector<2x128xf32>
    %106 = arith.mulf %90, %105 : vector<2x128xf32>
    %107 = vector.broadcast %25 : f32 to vector<2x128xf32>
    %108 = arith.mulf %92, %107 : vector<2x128xf32>
    %109 = arith.subf %106, %108 : vector<2x128xf32>
    %110 = vector.broadcast %26 : f32 to vector<2x128xf32>
    %111 = arith.addf %109, %110 : vector<2x128xf32>
    %112 = math.tanh %111 : vector<2x128xf32>
    %113 = arith.mulf %112, %112 : vector<2x128xf32>
    %114 = vector.broadcast %27 : f32 to vector<2x128xf32>
    %115 = arith.mulf %113, %114 : vector<2x128xf32>
    %116 = arith.addf %104, %115 : vector<2x128xf32>
    %c0_24 = arith.constant 0 : index
    %c3_25 = arith.constant 3 : index
    %c0_26 = arith.constant 0 : index
    %c0_27 = arith.constant 0 : index
    %117 = vector.load %arg3[%c0_24, %c3_25, %c0_26, %c0_27] : memref<1x4x2x128xf32, #tpu.memory_space<vmem>>, vector<1x1x2x128xf32>
    %118 = vector.shape_cast %117 : vector<1x1x2x128xf32> to vector<2x128xf32>
    %c0_28 = arith.constant 0 : index
    %c3_29 = arith.constant 3 : index
    %c0_30 = arith.constant 0 : index
    %c0_31 = arith.constant 0 : index
    %119 = vector.load %arg4[%c0_28, %c3_29, %c0_30, %c0_31] : memref<1x4x2x128xf32, #tpu.memory_space<vmem>>, vector<1x1x2x128xf32>
    %120 = vector.shape_cast %119 : vector<1x1x2x128xf32> to vector<2x128xf32>
    %121 = vector.broadcast %12 : f32 to vector<2x128xf32>
    %122 = arith.mulf %118, %121 : vector<2x128xf32>
    %123 = vector.broadcast %13 : f32 to vector<2x128xf32>
    %124 = arith.mulf %120, %123 : vector<2x128xf32>
    %125 = arith.subf %122, %124 : vector<2x128xf32>
    %126 = vector.broadcast %14 : f32 to vector<2x128xf32>
    %127 = arith.addf %125, %126 : vector<2x128xf32>
    %128 = math.tanh %127 : vector<2x128xf32>
    %129 = arith.mulf %128, %128 : vector<2x128xf32>
    %130 = vector.broadcast %15 : f32 to vector<2x128xf32>
    %131 = arith.mulf %129, %130 : vector<2x128xf32>
    %132 = arith.addf %116, %131 : vector<2x128xf32>
    %133 = vector.broadcast %28 : f32 to vector<2x128xf32>
    %134 = arith.mulf %118, %133 : vector<2x128xf32>
    %135 = vector.broadcast %29 : f32 to vector<2x128xf32>
    %136 = arith.mulf %120, %135 : vector<2x128xf32>
    %137 = arith.subf %134, %136 : vector<2x128xf32>
    %138 = vector.broadcast %30 : f32 to vector<2x128xf32>
    %139 = arith.addf %137, %138 : vector<2x128xf32>
    %140 = math.tanh %139 : vector<2x128xf32>
    %141 = arith.mulf %140, %140 : vector<2x128xf32>
    %142 = vector.broadcast %31 : f32 to vector<2x128xf32>
    %143 = arith.mulf %141, %142 : vector<2x128xf32>
    %144 = arith.addf %132, %143 : vector<2x128xf32>
    %145 = arith.negf %144 : vector<2x128xf32>
    %146 = math.exp %145 : vector<2x128xf32>
    %cst_32 = arith.constant 1.000000e+00 : f32
    %147 = vector.broadcast %cst_32 : f32 to vector<2x128xf32>
    %148 = arith.addf %147, %146 : vector<2x128xf32>
    %149 = arith.divf %147, %148 : vector<2x128xf32>
    %c0_33 = arith.constant 0 : index
    %c0_34 = arith.constant 0 : index
    %c0_35 = arith.constant 0 : index
    %150 = vector.load %arg5[%c0_33, %c0_34, %c0_35] : memref<1x2x128xf32, #tpu.memory_space<vmem>>, vector<1x2x128xf32>
    %151 = vector.shape_cast %150 : vector<1x2x128xf32> to vector<2x128xf32>
    %152 = vector.shape_cast %149 : vector<2x128xf32> to vector<1x2x128xf32>
    tpu.vector_store %arg5[%c0_33, %c0_34, %c0_35], %152 {strides = array<i32>} : memref<1x2x128xf32, #tpu.memory_space<vmem>>, vector<1x2x128xf32>,
    return
  }
  func.func @transform_0(%arg0: i32, %arg1: i32) -> i32 {
    %c0_i32 = arith.constant 0 : i32
    %c0_i32_0 = arith.constant 0 : i32
    return %c0_i32 : i32
  }
  func.func @transform_1(%arg0: i32, %arg1: i32) -> (i32, i32, i32, i32) {
    %c0_i32 = arith.constant 0 : i32
    %c0_i32_0 = arith.constant 0 : i32
    %c0_i32_1 = arith.constant 0 : i32
    return %arg0, %c0_i32, %arg1, %c0_i32_0 : i32, i32, i32, i32
  }
  func.func @transform_2(%arg0: i32, %arg1: i32) -> (i32, i32, i32, i32) {
    %c0_i32 = arith.constant 0 : i32
    %c0_i32_0 = arith.constant 0 : i32
    %c0_i32_1 = arith.constant 0 : i32
    return %arg0, %c0_i32, %arg1, %c0_i32_0 : i32, i32, i32, i32
  }
  func.func @transform_3(%arg0: i32, %arg1: i32) -> (i32, i32, i32) {
    %c0_i32 = arith.constant 0 : i32
    %c0_i32_0 = arith.constant 0 : i32
    return %arg0, %arg1, %c0_i32 : i32, i32, i32
  }
}

</mosaic_0001>

<llo_original>
// kernel: tpu_custom_call.1
$region0: #{tpu_custom_call.1}
  #allocation0 [shape = 'u32[]', space=smem, size = 0x4, offset = 0x4, fixed_abs, tag = 'smem constant byte address 0x4 - core index']
  #allocation1 [shape = 'u32[144,128]{1,0:T(1,128)}', space=vmem, size = 0x12000, scoped, tag = 'internal scratch']
  %s0 = inlined_call_operand.hbm [shape: f32[32], index: 0, kind: input, shape index: {}]
  %s1 = inlined_call_operand.hbm [shape: f32[2,4,2,128], index: 1, kind: input, shape index: {}]
  %s2 = inlined_call_operand.hbm [shape: f32[2,4,2,128], index: 2, kind: input, shape index: {}]
  %s3 = inlined_call_operand.hbm [shape: f32[2,2,128], index: 3, kind: output, shape index: {}]
  %s4 = sld [smem:[#allocation0]]
  $region57: #{tpu_custom_call.1} parent=0
    _
  %s6 = ssub.s32 1, %s4
  %s7 = scalar_select 0, %s6, %s4
  $region1: #{tpu_custom_call.1} parent=0
    #allocation2 [shape = 'u8[512]{0}', space=smem, size = 0x200, scoped, tag = 'input window, operand 0, single buffered']
    #allocation3 [shape = 's32[2]{0}', space=sflag, size = 0x8, scoped, tag = 'scoped memory for tpu_custom_call.1']
    #allocation4 [shape = 's32[2]{0}', space=sflag, size = 0x8, scoped, tag = 'scoped memory for tpu_custom_call.1']
    #allocation5 [shape = 's32[2]{0}', space=sflag, size = 0x8, scoped, tag = 'scoped memory for tpu_custom_call.1']
    #allocation6 [shape = 'u8[8192]{0}', space=vmem, size = 0x2000, scoped, tag = 'input window, operand 1']
    #allocation7 [shape = 'u8[8192]{0}', space=vmem, size = 0x2000, scoped, tag = 'input window, operand 2']
    #allocation8 [shape = 's32[2]{0}', space=sflag, size = 0x8, scoped, tag = 'scoped memory for tpu_custom_call.1']
    #allocation9 [shape = 'u8[2048]{0}', space=vmem, size = 0x800, scoped, tag = 'output window, operand 0']
    %8 = vsyncpa [#allocation5], 0
    %9 = vsyncpa [#allocation3], 0
    %s10 = scalar_lea.sflag [#allocation3], 1
    %11 = vsyncpa %s10, 0
    %12 = vsyncpa [#allocation8], 0
    %s13 = scalar_lea.sflag [#allocation8], 1
    %14 = vsyncpa %s13, 0
    %15 = vsyncpa [#allocation4], 0
    %s16 = scalar_lea.sflag [#allocation4], 1
    %17 = vsyncpa %s16, 0
    loop: start=0, step=1, limit=4
    $region2: #{tpu_custom_call.1} parent=1 // loop_pre_header
      _
    $region3: #{tpu_custom_call.1} parent=1 // loop_header
      %s19 = sphi 0, %s23
      %p20 = scmp.ge.s32.totalorder %s19, 4
      %s26 = sphi 0, %s38
      %s27 = sphi 0, %s34
      %s28 = sphi 0, %s26
      %s29 = sphi 0, %s27
      %s30 = sphi 0, %s28
      %s31 = sphi 0, %s29
      %s39 = sphi 0, %s39
      %s41 = sphi 0, %s39
      %s42 = sphi 0, %s41
      %s56 = sphi 0, %s42
      %s64 = sphi 0, %s66
      %s67 = sphi 0, %s64
      %s68 = sphi 0, %s67
      %s84 = sphi 0, %s68
      %s92 = sphi 0, %s94
      %s95 = sphi 0, %s92
      %s96 = sphi 0, %s95
      %s112 = sphi 0, %s96
      %s120 = sphi 0, %s122
      %s123 = sphi 0, %s120
      %s124 = sphi 0, %s123
      %s140 = sphi 0, %s124
    $region4: #{tpu_custom_call.1} parent=1 // loop_header_branch
      %22 = sbr.rel (%p20) target = $region8
    $region5: #{tpu_custom_call.1} parent=1 // loop_body
      %s24 = ssub.s32 %s19, 1
      %s25 = ssub.s32 %s19, 2
      %s32 = sadd.s32 1, %s27
      %p33 = scmp.ge.s32.totalorder %s32, 1
      %s34 = scalar_select %p33, 0, %s32
      %s35 = sadd.s32 1, %s26
      %s36 = scalar_select %p33, %s35, %s26
      %p37 = scmp.ge.s32.totalorder %s36, 2
      %s38 = scalar_select %p37, 0, %s36
      %s40 = sadd.s32 %s39, 1
      %p43 = scmp.eq.s32.totalorder %s19, 1
      %p44 = scmp.ne.s32.totalorder %s39, %s41
      %p45 = scmp.eq.s32.totalorder %s19, 0
      %p46 = por %p44, %p45
      %p47 = scmp.ne.s32.totalorder %s39, %s41
      %p48 = scmp.eq.s32.totalorder %s24, 1
      %p49 = por %p47, %p48
      %p50 = scmp.ne.s32.totalorder %s41, %s42
      %p51 = scmp.eq.s32.totalorder %s24, 0
      %p52 = por %p50, %p51
      %p53 = scmp.ne.s32.totalorder %s41, %s42
      %p54 = scmp.eq.s32.totalorder %s25, 1
      %p55 = por %p53, %p54
      %p57 = scmp.ne.s32.totalorder %s42, %s56
      %p58 = scmp.eq.s32.totalorder %s25, 0
      %p59 = por %p57, %p58
      %s60 = ssub.s32 %s26, %s38
      %s61 = ssub.s32 %s27, %s34
      %s62 = sor.u32 %s60, %s61
      %p63 = scmp.eq.s32.totalorder %s62, 0
      %s65 = sadd.s32 %s64, 1
      %s66 = scalar_select %p63, %s64, %s65
      %p69 = pneg %p63
      %p70 = scmp.eq.s32.totalorder %s19, 1
      %p71 = por %p69, %p70
      %p72 = scmp.ne.s32.totalorder %s64, %s67
      %p73 = scmp.eq.s32.totalorder %s19, 0
      %p74 = por %p72, %p73
      %p75 = scmp.ne.s32.totalorder %s64, %s67
      %p76 = scmp.eq.s32.totalorder %s24, 1
      %p77 = por %p75, %p76
      %p78 = scmp.ne.s32.totalorder %s67, %s68
      %p79 = scmp.eq.s32.totalorder %s24, 0
      %p80 = por %p78, %p79
      %p81 = scmp.ne.s32.totalorder %s67, %s68
      %p82 = scmp.eq.s32.totalorder %s25, 1
      %p83 = por %p81, %p82
      %p85 = scmp.ne.s32.totalorder %s68, %s84
      %p86 = scmp.eq.s32.totalorder %s25, 0
      %p87 = por %p85, %p86
      %s88 = ssub.s32 %s26, %s38
      %s89 = ssub.s32 %s27, %s34
      %s90 = sor.u32 %s88, %s89
      %p91 = scmp.eq.s32.totalorder %s90, 0
      %s93 = sadd.s32 %s92, 1
      %s94 = scalar_select %p91, %s92, %s93
      %p97 = pneg %p91
      %p98 = scmp.eq.s32.totalorder %s19, 1
      %p99 = por %p97, %p98
      %p100 = scmp.ne.s32.totalorder %s92, %s95
      %p101 = scmp.eq.s32.totalorder %s19, 0
      %p102 = por %p100, %p101
      %p103 = scmp.ne.s32.totalorder %s92, %s95
      %p104 = scmp.eq.s32.totalorder %s24, 1
      %p105 = por %p103, %p104
      %p106 = scmp.ne.s32.totalorder %s95, %s96
      %p107 = scmp.eq.s32.totalorder %s24, 0
      %p108 = por %p106, %p107
      %p109 = scmp.ne.s32.totalorder %s95, %s96
      %p110 = scmp.eq.s32.totalorder %s25, 1
      %p111 = por %p109, %p110
      %p113 = scmp.ne.s32.totalorder %s96, %s112
      %p114 = scmp.eq.s32.totalorder %s25, 0
      %p115 = por %p113, %p114
      %s116 = ssub.s32 %s26, %s38
      %s117 = ssub.s32 %s27, %s34
      %s118 = sor.u32 %s116, %s117
      %p119 = scmp.eq.s32.totalorder %s118, 0
      %s121 = sadd.s32 %s120, 1
      %s122 = scalar_select %p119, %s120, %s121
      %p125 = pneg %p119
      %p126 = scmp.eq.s32.totalorder %s19, 1
      %p127 = por %p125, %p126
      %p128 = scmp.ne.s32.totalorder %s120, %s123
      %p129 = scmp.eq.s32.totalorder %s19, 0
      %p130 = por %p128, %p129
      %p131 = scmp.ne.s32.totalorder %s120, %s123
      %p132 = scmp.eq.s32.totalorder %s24, 1
      %p133 = por %p131, %p132
      %p134 = scmp.ne.s32.totalorder %s123, %s124
      %p135 = scmp.eq.s32.totalorder %s24, 0
      %p136 = por %p134, %p135
      %p137 = scmp.ne.s32.totalorder %s123, %s124
      %p138 = scmp.eq.s32.totalorder %s25, 1
      %p139 = por %p137, %p138
      %p141 = scmp.ne.s32.totalorder %s124, %s140
      %p142 = scmp.eq.s32.totalorder %s25, 0
      %p143 = por %p141, %p142
      %p144 = scmp.le.s32.totalorder 1, %s19
      %p145 = scmp.lt.s32.totalorder %s19, 3
      %p146 = pnand %p144, %p145
      %p147 = pneg %p146
      // Predicated region
      $region9: #{tpu_custom_call.1} parent=5 // pred_check
        _
      $region10: #{tpu_custom_call.1} parent=5 // pred_check_branch
        %149 = sbr.rel (%p146) target = $region12
      $region11: #{tpu_custom_call.1} parent=5 // pred_region
        %s150 = ssub.s32 %s19, 1
        // Predicated region
        $region13: #{tpu_custom_call.1} parent=11 // pred_check
          %p151 = pneg %p52
        $region14: #{tpu_custom_call.1} parent=11 // pred_check_branch
          %153 = sbr.rel (%p151) target = $region16
        $region15: #{tpu_custom_call.1} parent=11 // pred_region
          %s155 = ssub.s32 16, 16
          %156 = vsyncadd [#allocation5], %s155
          %159 = dma.hbm_to_smem %s0, 16, [#allocation2], [#allocation5]
        $region16: #{tpu_custom_call.1} parent=11 // pred_fallthru
          _
      $region12: #{tpu_custom_call.1} parent=5 // pred_fallthru
        _
      %p160 = scmp.lt.s32.totalorder %s19, 2
      // Predicated region
      $region17: #{tpu_custom_call.1} parent=5 // pred_check
        %p161 = pneg %p160
      $region18: #{tpu_custom_call.1} parent=5 // pred_check_branch
        %163 = sbr.rel (%p161) target = $region20
      $region19: #{tpu_custom_call.1} parent=5 // pred_region
        // Predicated region
        $region21: #{tpu_custom_call.1} parent=19 // pred_check
          %p164 = pneg %p74
        $region22: #{tpu_custom_call.1} parent=19 // pred_check_branch
          %166 = sbr.rel (%p164) target = $region24
        $region23: #{tpu_custom_call.1} parent=19 // pred_region
          %s167 = sand.u32 %s64, 1
          %s168 = scalar_lea.sflag [#allocation3], %s167
          %s169 = sand.u32 %s64, 1
          %s170 = smul.addr %s169, 8
          %s171 = scalar_lea.vmem [#allocation6], %s170
          %s173 = ssub.s32 128, 128
          %174 = vsyncadd %s168, %s173
          %s175 = smul.addr %s26, 4
          %s176 = sadd.s32 %s27, %s175
          %s177 = smul.addr %s176, 32
          %s178 = scalar_lea.hbm %s1, %s177
          %s179 = sshll.u32 %s171, 4
          %s180 = int_to_ptr.vmem [resolvable:$true] %s179
          %185 = dma.hbm_to_vmem [thread:$0]  %s178, 128, %s180, %s168, 32, 32, 2
        $region24: #{tpu_custom_call.1} parent=19 // pred_fallthru
          _
        // Predicated region
        $region25: #{tpu_custom_call.1} parent=19 // pred_check
          %p186 = pneg %p102
        $region26: #{tpu_custom_call.1} parent=19 // pred_check_branch
          %188 = sbr.rel (%p186) target = $region28
        $region27: #{tpu_custom_call.1} parent=19 // pred_region
          %s189 = sand.u32 %s92, 1
          %s190 = scalar_lea.sflag [#allocation8], %s189
          %s191 = sand.u32 %s92, 1
          %s192 = smul.addr %s191, 8
          %s193 = scalar_lea.vmem [#allocation7], %s192
          %s195 = ssub.s32 128, 128
          %196 = vsyncadd %s190, %s195
          %s197 = smul.addr %s26, 4
          %s198 = sadd.s32 %s27, %s197
          %s199 = smul.addr %s198, 32
          %s200 = scalar_lea.hbm %s2, %s199
          %s201 = sshll.u32 %s193, 4
          %s202 = int_to_ptr.vmem [resolvable:$true] %s201
          %207 = dma.hbm_to_vmem [thread:$0]  %s200, 128, %s202, %s190, 32, 32, 2
        $region28: #{tpu_custom_call.1} parent=19 // pred_fallthru
          _
      $region20: #{tpu_custom_call.1} parent=5 // pred_fallthru
        _
      %p208 = scmp.le.s32.totalorder 1, %s19
      %p209 = scmp.lt.s32.totalorder %s19, 3
      %p210 = pnand %p208, %p209
      %p211 = pneg %p210
      // Predicated region
      $region29: #{tpu_custom_call.1} parent=5 // pred_check
        _
      $region30: #{tpu_custom_call.1} parent=5 // pred_check_branch
        %213 = sbr.rel (%p210) target = $region32
      $region31: #{tpu_custom_call.1} parent=5 // pred_region
        %s214 = ssub.s32 %s19, 1
        // Predicated region
        $region33: #{tpu_custom_call.1} parent=31 // pred_check
          %p215 = pneg %p52
        $region34: #{tpu_custom_call.1} parent=31 // pred_check_branch
          %217 = sbr.rel (%p215) target = $region36
        $region35: #{tpu_custom_call.1} parent=31 // pred_region
          %218 = dma.done [#allocation5], 16
        $region36: #{tpu_custom_call.1} parent=31 // pred_fallthru
          _
        %s219 = sand.u32 %s67, 1
        %s220 = scalar_lea.sflag [#allocation3], %s219
        %s221 = sand.u32 %s67, 1
        %s222 = smul.addr %s221, 8
        %s223 = scalar_lea.vmem [#allocation6], %s222
        // Predicated region
        $region37: #{tpu_custom_call.1} parent=31 // pred_check
          %p224 = pneg %p80
        $region38: #{tpu_custom_call.1} parent=31 // pred_check_branch
          %226 = sbr.rel (%p224) target = $region40
        $region39: #{tpu_custom_call.1} parent=31 // pred_region
          %227 = dma.done %s220, 128
        $region40: #{tpu_custom_call.1} parent=31 // pred_fallthru
          _
        %s228 = sand.u32 %s95, 1
        %s229 = scalar_lea.sflag [#allocation8], %s228
        %s230 = sand.u32 %s95, 1
        %s231 = smul.addr %s230, 8
        %s232 = scalar_lea.vmem [#allocation7], %s231
        // Predicated region
        $region41: #{tpu_custom_call.1} parent=31 // pred_check
          %p233 = pneg %p108
        $region42: #{tpu_custom_call.1} parent=31 // pred_check_branch
          %235 = sbr.rel (%p233) target = $region44
        $region43: #{tpu_custom_call.1} parent=31 // pred_region
          %236 = dma.done %s229, 128
        $region44: #{tpu_custom_call.1} parent=31 // pred_fallthru
          _
        %237 = sfence
        %p238 = pneg %p52
        %p239 = pneg %p49
        %s240 = sand.u32 %s67, 1
        %s241 = scalar_lea.sflag [#allocation3], %s240
        %s242 = sand.u32 %s67, 1
        %s243 = smul.addr %s242, 8
        %s244 = scalar_lea.vmem [#allocation6], %s243
        %p245 = pneg %p80
        %p246 = pneg %p77
        %s247 = sand.u32 %s95, 1
        %s248 = scalar_lea.sflag [#allocation8], %s247
        %s249 = sand.u32 %s95, 1
        %s250 = smul.addr %s249, 8
        %s251 = scalar_lea.vmem [#allocation7], %s250
        %p252 = pneg %p108
        %p253 = pneg %p105
        %p254 = pneg %p136
        %p255 = pneg %p133
        %s256 = sand.u32 %s123, 1
        %s257 = scalar_lea.sflag [#allocation4], %s256
        %s258 = sand.u32 %s123, 1
        %s259 = smul.addr %s258, 2
        %s260 = scalar_lea.vmem [#allocation9], %s259
        %s261 = sld [smem:[#allocation2]]
        %s262 = sld [smem:[#allocation2 + $0x8]]
        %s263 = sld [smem:[#allocation2 + $0x10]]
        %s264 = sld [smem:[#allocation2 + $0x18]]
        %s265 = sld [smem:[#allocation2 + $0x1]]
        %s266 = sld [smem:[#allocation2 + $0x9]]
        %s267 = sld [smem:[#allocation2 + $0x11]]
        %s268 = sld [smem:[#allocation2 + $0x19]]
        %s269 = sld [smem:[#allocation2 + $0x2]]
        %s270 = sld [smem:[#allocation2 + $0xa]]
        %s271 = sld [smem:[#allocation2 + $0x12]]
        %s272 = sld [smem:[#allocation2 + $0x1a]]
        %s273 = sld [smem:[#allocation2 + $0x3]]
        %s274 = sld [smem:[#allocation2 + $0xb]]
        %s275 = sld [smem:[#allocation2 + $0x13]]
        %s276 = sld [smem:[#allocation2 + $0x1b]]
        %s277 = sld [smem:[#allocation2 + $0x4]]
        %s278 = sld [smem:[#allocation2 + $0xc]]
        %s279 = sld [smem:[#allocation2 + $0x14]]
        %s280 = sld [smem:[#allocation2 + $0x1c]]
        %s281 = sld [smem:[#allocation2 + $0x5]]
        %s282 = sld [smem:[#allocation2 + $0xd]]
        %s283 = sld [smem:[#allocation2 + $0x15]]
        %s284 = sld [smem:[#allocation2 + $0x1d]]
        %s285 = sld [smem:[#allocation2 + $0x6]]
        %s286 = sld [smem:[#allocation2 + $0xe]]
        %s287 = sld [smem:[#allocation2 + $0x16]]
        %s288 = sld [smem:[#allocation2 + $0x1e]]
        %s289 = sld [smem:[#allocation2 + $0x7]]
        %s290 = sld [smem:[#allocation2 + $0xf]]
        %s291 = sld [smem:[#allocation2 + $0x17]]
        %s292 = sld [smem:[#allocation2 + $0x1f]]
        %v293 = vld [vmem:[%s223] sm:$0x3]
        %v294 = vld [vmem:[%s232] sm:$0x3]
        %v295 = vstv %s261
        %v296 = vmul.f32 %v293, %v295
        %v297 = vstv %s262
        %v298 = vmul.f32 %v294, %v297
        %v299 = vsub.f32 %v296, %v298
        %v300 = vstv %s263
        %v301 = vadd.f32 %v299, %v300
        %v302 = vtanh.pop %v301
        %v303 = vmul.f32 %v302, %v302
        %v304 = vstv %s264
        %v305 = vmul.f32 %v303, %v304
        %v306 = vadd.f32 %v305, -21.5
        %v307 = vstv %s277
        %v308 = vmul.f32 %v293, %v307
        %v309 = vstv %s278
        %v310 = vmul.f32 %v294, %v309
        %v311 = vsub.f32 %v308, %v310
        %v312 = vstv %s279
        %v313 = vadd.f32 %v311, %v312
        %v314 = vtanh.pop %v313
        %v315 = vmul.f32 %v314, %v314
        %v316 = vstv %s280
        %v317 = vmul.f32 %v315, %v316
        %v318 = vadd.f32 %v306, %v317
        %s319 = scalar_lea.vmem %s223, 2 [#allocation6]
        %v320 = vld [vmem:[%s319] sm:$0x3]
        %s321 = scalar_lea.vmem %s232, 2 [#allocation7]
        %v322 = vld [vmem:[%s321] sm:$0x3]
        %v323 = vstv %s265
        %v324 = vmul.f32 %v320, %v323
        %v325 = vstv %s266
        %v326 = vmul.f32 %v322, %v325
        %v327 = vsub.f32 %v324, %v326
        %v328 = vstv %s267
        %v329 = vadd.f32 %v327, %v328
        %v330 = vtanh.pop %v329
        %v331 = vmul.f32 %v330, %v330
        %v332 = vstv %s268
        %v333 = vmul.f32 %v331, %v332
        %v334 = vadd.f32 %v318, %v333
        %v335 = vstv %s281
        %v336 = vmul.f32 %v320, %v335
        %v337 = vstv %s282
        %v338 = vmul.f32 %v322, %v337
        %v339 = vsub.f32 %v336, %v338
        %v340 = vstv %s283
        %v341 = vadd.f32 %v339, %v340
        %v342 = vtanh.pop %v341
        %v343 = vmul.f32 %v342, %v342
        %v344 = vstv %s284
        %v345 = vmul.f32 %v343, %v344
        %v346 = vadd.f32 %v334, %v345
        %s347 = scalar_lea.vmem %s223, 4 [#allocation6]
        %v348 = vld [vmem:[%s347] sm:$0x3]
        %s349 = scalar_lea.vmem %s232, 4 [#allocation7]
        %v350 = vld [vmem:[%s349] sm:$0x3]
        %v351 = vstv %s269
        %v352 = vmul.f32 %v348, %v351
        %v353 = vstv %s270
        %v354 = vmul.f32 %v350, %v353
        %v355 = vsub.f32 %v352, %v354
        %v356 = vstv %s271
        %v357 = vadd.f32 %v355, %v356
        %v358 = vtanh.pop %v357
        %v359 = vmul.f32 %v358, %v358
        %v360 = vstv %s272
        %v361 = vmul.f32 %v359, %v360
        %v362 = vadd.f32 %v346, %v361
        %v363 = vstv %s285
        %v364 = vmul.f32 %v348, %v363
        %v365 = vstv %s286
        %v366 = vmul.f32 %v350, %v365
        %v367 = vsub.f32 %v364, %v366
        %v368 = vstv %s287
        %v369 = vadd.f32 %v367, %v368
        %v370 = vtanh.pop %v369
        %v371 = vmul.f32 %v370, %v370
        %v372 = vstv %s288
        %v373 = vmul.f32 %v371, %v372
        %v374 = vadd.f32 %v362, %v373
        %s375 = scalar_lea.vmem %s223, 6 [#allocation6]
        %v376 = vld [vmem:[%s375] sm:$0x3]
        %s377 = scalar_lea.vmem %s232, 6 [#allocation7]
        %v378 = vld [vmem:[%s377] sm:$0x3]
        %v379 = vstv %s273
        %v380 = vmul.f32 %v376, %v379
        %v381 = vstv %s274
        %v382 = vmul.f32 %v378, %v381
        %v383 = vsub.f32 %v380, %v382
        %v384 = vstv %s275
        %v385 = vadd.f32 %v383, %v384
        %v386 = vtanh.pop %v385
        %v387 = vmul.f32 %v386, %v386
        %v388 = vstv %s276
        %v389 = vmul.f32 %v387, %v388
        %v390 = vadd.f32 %v374, %v389
        %v391 = vstv %s289
        %v392 = vmul.f32 %v376, %v391
        %v393 = vstv %s290
        %v394 = vmul.f32 %v378, %v393
        %v395 = vsub.f32 %v392, %v394
        %v396 = vstv %s291
        %v397 = vadd.f32 %v395, %v396
        %v398 = vtanh.pop %v397
        %v399 = vmul.f32 %v398, %v398
        %v400 = vstv %s292
        %v401 = vmul.f32 %v399, %v400
        %v402 = vadd.f32 %v390, %v401
        %v403 = vxor.u32 %v402, 2147483648
        %v404 = vmul.f32 %v403, 1.442695
        %v405 = vpow.pop %v404
        %v406 = vadd.f32 %v405, 1.0
        %v407 = vrcp.pop %v406
        %v408 = vmul.f32 1.0, %v407
        %409 = vst [vmem:[%s260] sm:$0x3] %v408
        %s410 = sand.u32 %s123, 1
        %s411 = scalar_lea.sflag [#allocation4], %s410
        %s412 = sand.u32 %s123, 1
        %s413 = smul.addr %s412, 2
        %s414 = scalar_lea.vmem [#allocation9], %s413
        // Predicated region
        $region45: #{tpu_custom_call.1} parent=31 // pred_check
          %p415 = pneg %p133
        $region46: #{tpu_custom_call.1} parent=31 // pred_check_branch
          %417 = sbr.rel (%p415) target = $region48
        $region47: #{tpu_custom_call.1} parent=31 // pred_region
          %s419 = ssub.s32 32, 32
          %420 = vsyncadd %s411, %s419
          %s421 = sadd.s32 %s29, %s28
          %s422 = smul.addr %s421, 32
          %s423 = scalar_lea.hbm %s3, %s422
          %s425 = sshll.u32 %s414, 4
          %s426 = int_to_ptr.vmem [resolvable:$true] %s425
          %428 = dma.vmem_to_hbm [thread:$0]  %s426, 32, %s423, %s411
        $region48: #{tpu_custom_call.1} parent=31 // pred_fallthru
          _
      $region32: #{tpu_custom_call.1} parent=5 // pred_fallthru
        _
      %p429 = scmp.le.s32.totalorder 2, %s19
      // Predicated region
      $region49: #{tpu_custom_call.1} parent=5 // pred_check
        %p430 = pneg %p429
      $region50: #{tpu_custom_call.1} parent=5 // pred_check_branch
        %432 = sbr.rel (%p430) target = $region52
      $region51: #{tpu_custom_call.1} parent=5 // pred_region
        %s433 = ssub.s32 %s19, 2
        // Predicated region
        $region53: #{tpu_custom_call.1} parent=51 // pred_check
          %p434 = pneg %p139
        $region54: #{tpu_custom_call.1} parent=51 // pred_check_branch
          %436 = sbr.rel (%p434) target = $region56
        $region55: #{tpu_custom_call.1} parent=51 // pred_region
          %s437 = sand.u32 %s124, 1
          %s438 = scalar_lea.sflag [#allocation4], %s437
          %s439 = sand.u32 %s124, 1
          %s440 = smul.addr %s439, 2
          %s441 = scalar_lea.vmem [#allocation9], %s440
          %442 = dma.done %s438, 32
        $region56: #{tpu_custom_call.1} parent=51 // pred_fallthru
          _
      $region52: #{tpu_custom_call.1} parent=5 // pred_fallthru
        _
    $region6: #{tpu_custom_call.1} parent=1 // loop_footer
      %s23 = sadd.s32 1, %s19
    $region7: #{tpu_custom_call.1} parent=1 // loop_footer_branch
      %18 = sbr.rel target = $region3
    $region8: #{tpu_custom_call.1} parent=1 // loop_exit
      _
    %443 = vsyncpa [#allocation3], 1
    %s444 = scalar_lea.sflag [#allocation3], 1
    %445 = vsyncpa %s444, 1
    %446 = vsyncpa [#allocation8], 1
    %s447 = scalar_lea.sflag [#allocation8], 1
    %448 = vsyncpa %s447, 1
    %449 = vsyncpa [#allocation4], 1
    %s450 = scalar_lea.sflag [#allocation4], 1
    %451 = vsyncpa %s450, 1
    %452 = vsyncpa [#allocation5], 1
    %s453 = scalar_lea.sflag [#allocation5], 1
    %454 = vsyncpa %s453, 1

</llo_original>
